<compile_context>
chip_gen: v7x
topology: tpu7x:2x2x1
jax: 0.10.0
libtpu: 0.0.40
codegen_flags: <defaults>
</compile_context>

<pallas_src>
import jax
import jax.numpy as jnp
from jax import lax
from jax.experimental import pallas as pl
from jax.experimental.pallas import tpu as pltpu


def _sum_sq_diff(p_ref, t_ref, *, n_full, partial_valid, slab_rows, width):
    """Sum of (p - t)^2 over the first n_full*slab_rows (+ partial_valid) rows,
    folded into a (slab_rows, width) f32 value kept in vregs (not VMEM)."""
    acc = jnp.zeros((slab_rows, width), jnp.float32)

    def add_slab(a, row_slice):
        pr = p_ref[row_slice, :].astype(jnp.float32)
        tr = t_ref[row_slice, :].astype(jnp.float32)
        d = pr - tr
        return a + d * d

    if n_full > 0:
        if n_full <= 16:
            # Short fixed trip count: unroll statically for LLO visibility.
            for r in range(n_full):
                acc = add_slab(acc, pl.ds(r * slab_rows, slab_rows))
        else:
            def body(r, a):
                start = pl.multiple_of(r * slab_rows, slab_rows)
                return add_slab(a, pl.ds(start, slab_rows))
            acc = lax.fori_loop(0, n_full, body, acc)

    if partial_valid:
        # One trailing slab with only `partial_valid` valid rows; the rest is
        # edge-block / padding garbage -> zero it out BEFORE squaring.
        start = n_full * slab_rows
        pr = p_ref[pl.ds(start, slab_rows), :].astype(jnp.float32)
        tr = t_ref[pl.ds(start, slab_rows), :].astype(jnp.float32)
        d = pr - tr
        rid = lax.broadcasted_iota(jnp.int32, d.shape, 0)
        d = jnp.where(rid < partial_valid, d, jnp.float32(0.0))
        acc = acc + d * d

    return acc


def _make_mse_kernel(*, slab_rows, width, block_rows, inner, total_blocks,
                     rows_in_last, num_splits):
    n_slabs = block_rows // slab_rows
    tail_is_full = (rows_in_last == block_rows)
    tail_n_full = rows_in_last // slab_rows
    tail_partial = rows_in_last % slab_rows
    has_dup_step = (num_splits * inner) > total_blocks

    def kernel(p_ref, t_ref, out_ref):
        i = pl.program_id(1)

        @pl.when(i == 0)
        def _():
            out_ref[...] = jnp.zeros_like(out_ref)

        gb = pl.program_id(0) * inner + i  # raw global row-block index

        def accum_full():
            out_ref[...] += _sum_sq_diff(
                p_ref, t_ref, n_full=n_slabs, partial_valid=0,
                slab_rows=slab_rows, width=width)

        def accum_tail():
            out_ref[...] += _sum_sq_diff(
                p_ref, t_ref, n_full=tail_n_full, partial_valid=tail_partial,
                slab_rows=slab_rows, width=width)

        if total_blocks == 1:
            (accum_full if tail_is_full else accum_tail)()
        elif tail_is_full and not has_dup_step:
            accum_full()
        elif tail_is_full:
            # Odd block count: the duplicated trailing megacore step
            # (gb >= total_blocks) must not accumulate again.
            pl.when(gb < total_blocks)(accum_full)
        else:
            pl.when(gb < total_blocks - 1)(accum_full)
            pl.when(gb == total_blocks - 1)(accum_tail)
            # gb > total_blocks - 1 (duplicated step): accumulate nothing.

    return kernel


def mse_loss(pred, target, *, target_tile_bytes=4 << 20):
    """Mean squared error over all elements (PyTorch nn.MSELoss default)."""
    assert pred.shape == target.shape, "nn.MSELoss expects matching shapes"
    n = pred.size
    assert n > 0

    if pred.dtype != target.dtype:
        ct = jnp.promote_types(pred.dtype, target.dtype)
        pred = pred.astype(ct)
        target = target.astype(ct)
    dtype = pred.dtype
    out_dtype = dtype if jnp.issubdtype(dtype, jnp.floating) else jnp.float32

    p = pred.reshape(-1)
    t = target.reshape(-1)

    # Lane-dense column width: prefer one that divides n (free view, no padded
    # copy) and yields >= 8 rows (full sublanes).
    width = None
    for cand in (512, 256, 128):
        if n % cand == 0 and (n // cand) >= 8:
            width = cand
            break
    if width is None:
        for cand in (512, 256, 128):
            if n % cand == 0:
                width = cand
                break
    if width is None:
        # Rare fallback (n not a multiple of 128): zero-pad the tail only; the
        # pad contributes 0 to the sum of squared differences.
        width = 128
        pad = pl.cdiv(n, width) * width - n
        p = jnp.pad(p, (0, pad))
        t = jnp.pad(t, (0, pad))

    rows = p.size // width
    p2 = p.reshape(rows, width)
    t2 = t.reshape(rows, width)

    itemsize = int(jnp.dtype(dtype).itemsize)
    slab_rows = max(8, 32 // max(itemsize, 1))   # 8 f32 / 16 bf16 / 32 int8

    # Dtype-aware row-block: ~target_tile_bytes of input dtype per input per
    # step, rounded to the sublane packing multiple, capped so the VMEM budget
    # (2 inputs x 2 buffers) stays safe on every chip generation.
    tile_target = int(min(max(target_tile_bytes, width * itemsize * slab_rows),
                          8 << 20))
    br = max(slab_rows,
             (tile_target // (width * itemsize)) // slab_rows * slab_rows)
    rows_padded = pl.cdiv(rows, slab_rows) * slab_rows
    block_rows = min(br, rows_padded)            # always multiple of slab_rows
    total_blocks = pl.cdiv(rows, block_rows)
    rows_in_last = rows - (total_blocks - 1) * block_rows

    # Always 2-way split along the leading "parallel" axis when there is more
    # than one block (odd counts get one clamped + skipped duplicate step), so
    # v7x megacore never leaves a TensorCore idle.  No-op on v5e/v6e.
    num_splits = 2 if total_blocks >= 2 else 1
    inner = pl.cdiv(total_blocks, num_splits)

    kernel = _make_mse_kernel(
        slab_rows=slab_rows, width=width, block_rows=block_rows, inner=inner,
        total_blocks=total_blocks, rows_in_last=rows_in_last,
        num_splits=num_splits)

    def in_map(s, i):
        return (jnp.minimum(s * inner + i, total_blocks - 1), 0)

    tile_bytes = block_rows * width * itemsize
    # 2 inputs x 2 pipeline buffers + resident outputs + headroom.
    vmem_limit = int(min(
        max(4 * tile_bytes + num_splits * slab_rows * width * 4 * 2 + (4 << 20),
            16 << 20),
        48 << 20))

    partials = pl.pallas_call(
        kernel,
        out_shape=jax.ShapeDtypeStruct((num_splits * slab_rows, width),
                                       jnp.float32),
        grid_spec=pltpu.PrefetchScalarGridSpec(
            num_scalar_prefetch=0,
            grid=(num_splits, inner),
            in_specs=[
                # pipeline_mode=pl.Buffered(3) only if a trace shows exposed
                # DMA between steps (most likely on v7x); default 2 is fine.
                pl.BlockSpec((block_rows, width), in_map),
                pl.BlockSpec((block_rows, width), in_map),
            ],
            out_specs=pl.BlockSpec((slab_rows, width), lambda s, i: (s, 0)),
        ),
        compiler_params=pltpu.CompilerParams(
            dimension_semantics=("parallel", "arbitrary"),
            vmem_limit_bytes=vmem_limit),
    )(p2, t2)

    loss = jnp.sum(partials, dtype=jnp.float32) / jnp.float32(n)
    return loss.astype(out_dtype)


if __name__ == "__main__":
    key = jax.random.PRNGKey(0)
    k1, k2, k3, k4, k5, k6, k7, k8 = jax.random.split(key, 8)

    def ref_mse(a, b):
        return jnp.mean((a.astype(jnp.float32) - b.astype(jnp.float32)) ** 2)

    # 1) Small NCHW segmentation-style inputs (single-block, static-unroll path).
    pred = jax.random.normal(k1, (2, 4, 16, 16), dtype=jnp.float32)
    target = jax.random.normal(k2, (2, 4, 16, 16), dtype=jnp.float32)
    loss = mse_loss(pred, target)
    jax.block_until_ready(loss)
    assert jnp.allclose(loss, ref_mse(pred, target), rtol=1e-5, atol=1e-6), loss

    # 2) Larger f32 input (single big block, fori-loop fold path).
    pred2 = jax.random.normal(k3, (2, 16, 96, 128), dtype=jnp.float32)
    target2 = jax.random.normal(k4, (2, 16, 96, 128), dtype=jnp.float32)
    loss2 = mse_loss(pred2, target2)
    jax.block_until_ready(loss2)
    assert jnp.allclose(loss2, ref_mse(pred2, target2), rtol=1e-5, atol=1e-6), loss2

    # 3) bf16 inputs (dtype-aware tiles, 16-row sublane packing) with a small
    #    tile override to exercise the multi-block + 2-way-split path.
    pred3 = jax.random.normal(k5, (2, 16, 96, 128), dtype=jnp.bfloat16)
    target3 = jax.random.normal(k6, (2, 16, 96, 128), dtype=jnp.bfloat16)
    loss3 = mse_loss(pred3, target3, target_tile_bytes=128 * 1024)
    jax.block_until_ready(loss3)
    assert jnp.allclose(loss3.astype(jnp.float32), ref_mse(pred3, target3),
                        rtol=2e-2, atol=2e-2), loss3

    # 4) Odd block count + partial tail block + clamped/skipped duplicate step.
    pred4 = jax.random.normal(k7, (3, 8, 100, 128), dtype=jnp.float32)
    target4 = jax.random.normal(k8, (3, 8, 100, 128), dtype=jnp.float32)
    loss4 = mse_loss(pred4, target4, target_tile_bytes=64 * 1024)
    jax.block_until_ready(loss4)
    assert jnp.allclose(loss4, ref_mse(pred4, target4), rtol=1e-5, atol=1e-6), loss4

    # 5) n not a multiple of 128 (tail-pad fallback + masked partial slab).
    pred5 = jax.random.normal(k1, (3, 5, 7, 11), dtype=jnp.float32)
    target5 = jax.random.normal(k2, (3, 5, 7, 11), dtype=jnp.float32)
    loss5 = mse_loss(pred5, target5)
    jax.block_until_ready(loss5)
    assert jnp.allclose(loss5, ref_mse(pred5, target5), rtol=1e-5, atol=1e-6), loss5

    print("KERNEL_OK")
</pallas_src>

<mosaic_0001>
module attributes {stable_mosaic.version = 11 : i64} {
  func.func @kernel(%arg0: i32, %arg1: i32, %arg2: memref<8x256xf32, #tpu.memory_space<vmem>>, %arg3: memref<8x256xf32, #tpu.memory_space<vmem>>, %arg4: memref<8x256xf32, #tpu.memory_space<vmem>>) attributes {dimension_semantics = [#tpu.dimension_semantics<parallel>, #tpu.dimension_semantics<arbitrary>], iteration_bounds = array<i64: 1, 1>, scalar_prefetch = 0 : i64, scratch_operands = 0 : i64, tpu.core_type = #tpu.core_type<tc>, window_params = [{transform_indices = @transform_0, window_bounds = array<i64: 8, 256>}, {transform_indices = @transform_1, window_bounds = array<i64: 8, 256>}, {transform_indices = @transform_2, window_bounds = array<i64: 8, 256>}]} {
    %c0_i32 = arith.constant 0 : i32
    %0 = arith.cmpi eq, %arg1, %c0_i32 : i32
    %1 = arith.extui %0 : i1 to i32
    %c0_i32_0 = arith.constant 0 : i32
    %2 = arith.cmpi ne, %1, %c0_i32_0 : i32
    scf.if %2 {
      %cst_8 = arith.constant 0.000000e+00 : f32
      %12 = vector.broadcast %cst_8 : f32 to vector<8x256xf32>
      %c0_9 = arith.constant 0 : index
      %c0_10 = arith.constant 0 : index
      %13 = vector.load %arg4[%c0_9, %c0_10] : memref<8x256xf32, #tpu.memory_space<vmem>>, vector<8x256xf32>
      tpu.vector_store %arg4[%c0_9, %c0_10], %12 {strides = array<i32>} : memref<8x256xf32, #tpu.memory_space<vmem>>, vector<8x256xf32>,
    } else {
    }
    %c0 = arith.constant 0 : index
    %c0_1 = arith.constant 0 : index
    %3 = vector.load %arg4[%c0, %c0_1] : memref<8x256xf32, #tpu.memory_space<vmem>>, vector<8x256xf32>
    %cst = arith.constant 0.000000e+00 : f32
    %4 = vector.broadcast %cst : f32 to vector<8x256xf32>
    %c0_2 = arith.constant 0 : index
    %c0_3 = arith.constant 0 : index
    %5 = vector.load %arg2[%c0_2, %c0_3] : memref<8x256xf32, #tpu.memory_space<vmem>>, vector<8x256xf32>
    %c0_4 = arith.constant 0 : index
    %c0_5 = arith.constant 0 : index
    %6 = vector.load %arg3[%c0_4, %c0_5] : memref<8x256xf32, #tpu.memory_space<vmem>>, vector<8x256xf32>
    %7 = arith.subf %5, %6 : vector<8x256xf32>
    %8 = arith.mulf %7, %7 : vector<8x256xf32>
    %9 = arith.addf %4, %8 : vector<8x256xf32>
    %10 = arith.addf %3, %9 : vector<8x256xf32>
    %c0_6 = arith.constant 0 : index
    %c0_7 = arith.constant 0 : index
    %11 = vector.load %arg4[%c0_6, %c0_7] : memref<8x256xf32, #tpu.memory_space<vmem>>, vector<8x256xf32>
    tpu.vector_store %arg4[%c0_6, %c0_7], %10 {strides = array<i32>} : memref<8x256xf32, #tpu.memory_space<vmem>>, vector<8x256xf32>,
    return
  }
  func.func @transform_0(%arg0: i32, %arg1: i32) -> (i32, i32) {
    %c1_i32 = arith.constant 1 : i32
    %0 = arith.muli %arg0, %c1_i32 : i32
    %1 = arith.addi %0, %arg1 : i32
    %c0_i32 = arith.constant 0 : i32
    %2 = arith.minsi %1, %c0_i32 : i32
    %c0_i32_0 = arith.constant 0 : i32
    %c0_i32_1 = arith.constant 0 : i32
    return %2, %c0_i32_0 : i32, i32
  }
  func.func @transform_1(%arg0: i32, %arg1: i32) -> (i32, i32) {
    %c1_i32 = arith.constant 1 : i32
    %0 = arith.muli %arg0, %c1_i32 : i32
    %1 = arith.addi %0, %arg1 : i32
    %c0_i32 = arith.constant 0 : i32
    %2 = arith.minsi %1, %c0_i32 : i32
    %c0_i32_0 = arith.constant 0 : i32
    %c0_i32_1 = arith.constant 0 : i32
    return %2, %c0_i32_0 : i32, i32
  }
  func.func @transform_2(%arg0: i32, %arg1: i32) -> (i32, i32) {
    %c0_i32 = arith.constant 0 : i32
    %c0_i32_0 = arith.constant 0 : i32
    return %arg0, %c0_i32 : i32, i32
  }
}

</mosaic_0001>

<llo_original>
// kernel: tpu_custom_call.1
$region0: #{tpu_custom_call.1}
  #allocation0 [shape = 'u32[]', space=smem, size = 0x4, offset = 0x4, fixed_abs, tag = 'smem constant byte address 0x4 - core index']
  #allocation1 [shape = 'u32[144,128]{1,0:T(1,128)}', space=vmem, size = 0x12000, scoped, tag = 'internal scratch']
  %s0 = inlined_call_operand.hbm [shape: f32[8,256], index: 0, kind: input, shape index: {}]
  %s1 = inlined_call_operand.hbm [shape: f32[8,256], index: 1, kind: input, shape index: {}]
  %s2 = inlined_call_operand.hbm [shape: f32[8,256], index: 2, kind: output, shape index: {}]
  %s3 = sld [smem:[#allocation0]]
  $region30: #{tpu_custom_call.1} parent=0
    _
  %s5 = ssub.s32 1, %s3
  %s6 = scalar_select 0, %s5, %s3
  $region1: #{tpu_custom_call.1} parent=0
    #allocation2 [shape = 'u8[8192]{0}', space=vmem, size = 0x2000, scoped, tag = 'input window, operand 0, single buffered']
    #allocation3 [shape = 's32[1]{0}', space=sflag, size = 0x4, scoped, tag = 'scoped memory for tpu_custom_call.1']
    #allocation4 [shape = 's32[1]{0}', space=sflag, size = 0x4, scoped, tag = 'scoped memory for tpu_custom_call.1']
    #allocation5 [shape = 'u8[8192]{0}', space=vmem, size = 0x2000, scoped, tag = 'input window, operand 1, single buffered']
    #allocation6 [shape = 's32[1]{0}', space=sflag, size = 0x4, scoped, tag = 'scoped memory for tpu_custom_call.1']
    #allocation7 [shape = 'u8[8192]{0}', space=vmem, size = 0x2000, scoped, tag = 'output window, operand 0, single buffered']
    %7 = vsyncpa [#allocation3], 0
    %8 = vsyncpa [#allocation6], 0
    %9 = vsyncpa [#allocation4], 0
    // Predicated region
    $region2: #{tpu_custom_call.1} parent=1 // pred_check
      _
    $region3: #{tpu_custom_call.1} parent=1 // pred_check_branch
      %11 = sbr.rel (0) target = $region5
    $region4: #{tpu_custom_call.1} parent=1 // pred_region
      %s12 = sadd.s32 0, 0
      %p13 = scmp.lt.s32.totalorder %s12, 0
      %s14 = scalar_select %p13, %s12, 0
      %s16 = ssub.s32 256, 256
      %17 = vsyncadd [#allocation3], %s16
      %s18 = smul.addr %s14, 2
      %s19 = smul.addr %s18, 128
      %s20 = scalar_lea.hbm %s0, %s19
      %s22 = sshll.u32 [#allocation2], 4
      %s23 = int_to_ptr.vmem [resolvable:$true] %s22
      %25 = dma.hbm_to_vmem [thread:$0]  %s20, 256, %s23, [#allocation3]
    $region5: #{tpu_custom_call.1} parent=1 // pred_fallthru
      _
    // Predicated region
    $region6: #{tpu_custom_call.1} parent=1 // pred_check
      _
    $region7: #{tpu_custom_call.1} parent=1 // pred_check_branch
      %27 = sbr.rel (0) target = $region9
    $region8: #{tpu_custom_call.1} parent=1 // pred_region
      %s28 = sadd.s32 0, 0
      %p29 = scmp.lt.s32.totalorder %s28, 0
      %s30 = scalar_select %p29, %s28, 0
      %s32 = ssub.s32 256, 256
      %33 = vsyncadd [#allocation6], %s32
      %s34 = smul.addr %s30, 2
      %s35 = smul.addr %s34, 128
      %s36 = scalar_lea.hbm %s1, %s35
      %s38 = sshll.u32 [#allocation5], 4
      %s39 = int_to_ptr.vmem [resolvable:$true] %s38
      %41 = dma.hbm_to_vmem [thread:$0]  %s36, 256, %s39, [#allocation6]
    $region9: #{tpu_custom_call.1} parent=1 // pred_fallthru
      _
    // Predicated region
    $region10: #{tpu_custom_call.1} parent=1 // pred_check
      _
    $region11: #{tpu_custom_call.1} parent=1 // pred_check_branch
      %43 = sbr.rel (0) target = $region13
    $region12: #{tpu_custom_call.1} parent=1 // pred_region
      %44 = dma.done [#allocation3], 256
    $region13: #{tpu_custom_call.1} parent=1 // pred_fallthru
      _
    // Predicated region
    $region14: #{tpu_custom_call.1} parent=1 // pred_check
      _
    $region15: #{tpu_custom_call.1} parent=1 // pred_check_branch
      %46 = sbr.rel (0) target = $region17
    $region16: #{tpu_custom_call.1} parent=1 // pred_region
      %47 = dma.done [#allocation6], 256
    $region17: #{tpu_custom_call.1} parent=1 // pred_fallthru
      _
    %s48 = sadd.s32 0, 0
    %p49 = scmp.lt.s32.totalorder %s48, 0
    %s50 = scalar_select %p49, %s48, 0
    %s51 = sadd.s32 0, 0
    %p52 = scmp.lt.s32.totalorder %s51, 0
    %s53 = scalar_select %p52, %s51, 0
    %p54 = scmp.eq.s32.totalorder 0, 0
    // Predicated region
    $region18: #{tpu_custom_call.1} parent=1 // pred_check
      %p55 = pneg %p54
    $region19: #{tpu_custom_call.1} parent=1 // pred_check_branch
      %57 = sbr.rel (%p55) target = $region21
    $region20: #{tpu_custom_call.1} parent=1 // pred_region
      %58 = vst [vmem:[#allocation7] sm:$0xff] 0.0
      %59 = vst [vmem:[#allocation7 + $0x8] sm:$0xff] 0.0
    $region21: #{tpu_custom_call.1} parent=1 // pred_fallthru
      _
    %v60 = vld [vmem:[#allocation7] sm:$0xff]
    %v61 = vld [vmem:[#allocation7 + $0x8] sm:$0xff]
    %v62 = vld [vmem:[#allocation2] sm:$0xff]
    %v63 = vld [vmem:[#allocation2 + $0x8] sm:$0xff]
    %v64 = vld [vmem:[#allocation5] sm:$0xff]
    %v65 = vld [vmem:[#allocation5 + $0x8] sm:$0xff]
    %v66 = vsub.f32 %v62, %v64
    %v67 = vsub.f32 %v63, %v65
    %v68 = vmul.f32 %v66, %v66
    %v69 = vmul.f32 %v67, %v67
    %v70 = vadd.f32 %v68, 0.0
    %v71 = vadd.f32 %v69, 0.0
    %v72 = vadd.f32 %v60, %v70
    %v73 = vadd.f32 %v61, %v71
    %74 = vst [vmem:[#allocation7] sm:$0xff] %v72
    %75 = vst [vmem:[#allocation7 + $0x8] sm:$0xff] %v73
    // Predicated region
    $region22: #{tpu_custom_call.1} parent=1 // pred_check
      _
    $region23: #{tpu_custom_call.1} parent=1 // pred_check_branch
      %77 = sbr.rel (0) target = $region25
    $region24: #{tpu_custom_call.1} parent=1 // pred_region
      %s79 = ssub.s32 256, 256
      %80 = vsyncadd [#allocation4], %s79
      %s82 = sshll.u32 [#allocation7], 4
      %s83 = int_to_ptr.vmem [resolvable:$true] %s82
      %85 = dma.vmem_to_hbm [thread:$0]  %s83, 256, %s2, [#allocation4]
    $region25: #{tpu_custom_call.1} parent=1 // pred_fallthru
      _
    // Predicated region
    $region26: #{tpu_custom_call.1} parent=1 // pred_check
      _
    $region27: #{tpu_custom_call.1} parent=1 // pred_check_branch
      %87 = sbr.rel (0) target = $region29
    $region28: #{tpu_custom_call.1} parent=1 // pred_region
      %88 = dma.done [#allocation4], 256
    $region29: #{tpu_custom_call.1} parent=1 // pred_fallthru
      _
    %89 = vsyncpa [#allocation3], 1
    %90 = vsyncpa [#allocation6], 1
    %91 = vsyncpa [#allocation4], 1

</llo_original>
